<compile_context>
chip_gen: v6e
topology: v6e:2x2x1
jax: 0.10.0
libtpu: 0.0.40
codegen_flags: <defaults>
</compile_context>

<pallas_src>
import math

import jax
import jax.numpy as jnp
from jax.experimental import pallas as pl
from jax.experimental.pallas import tpu as pltpu

EPS = 1e-8
_LANE = 128
_SUBLANE = 8


def _round_up(v, m):
    return (v + m - 1) // m * m


def _nalu_kernel(x_ref, wg_ref, o_ref):
    x = x_ref[...]                                  # [tb, in_p]
    tb = x.shape[0]
    out_p = wg_ref.shape[1] // 2

    # Static, 128-aligned slices of the resident weight block (no copies).
    w = wg_ref[:, :out_p]                           # NAC weight, [in_p, out_p]
    g_w = wg_ref[:, out_p:]                         # gate weight, [in_p, out_p]

    # Dot 1: stack x and log(|x|+eps) so W is pushed to the MXU once with a
    # tall M; every output element of this dot is used (no junk quadrant).
    log_x = jnp.log(jnp.abs(x) + EPS)
    lhs = jnp.concatenate([x, log_x], axis=0)       # [2*tb, in_p]
    aw = jnp.dot(lhs, w, preferred_element_type=jnp.float32)   # [2*tb, out_p]
    a = aw[:tb]                                     # x @ W
    pre_m = aw[tb:]                                 # log(|x|+eps) @ W

    # Dot 2: gate pre-activation.
    gate_pre = jnp.dot(x, g_w, preferred_element_type=jnp.float32)  # [tb, out_p]

    g = jax.nn.sigmoid(gate_pre)
    m = jnp.exp(pre_m)
    # g*a + (1-g)*m  ==  m + g*(a - m)   (one fewer multiply per element)
    o_ref[...] = (m + g * (a - m)).astype(o_ref.dtype)


def _cap_batch_tile(tb, in_p, out_p, budget_bytes):
    """Shrink tb until the per-step VMEM footprint fits the budget."""
    def footprint(t):
        weights = 2 * in_p * (2 * out_p) * 4          # resident [W | G] block
        io = 2 * (t * in_p + t * out_p) * 4           # double-buffered x / out tiles
        temps = (2 * t * in_p + 4 * t * out_p) * 4    # lhs stack, dot results, epilogue
        return weights + io + temps
    while tb > _SUBLANE and footprint(tb) > budget_bytes:
        tb = _round_up(tb // 2, _SUBLANE)
    return tb


def nalu_forward(x, g_w, w_hat, m_hat, *, batch_tile=512,
                 vmem_budget_bytes=20 << 20):
    """x: [B, in_dim]; g_w / w_hat / m_hat: [out_dim, in_dim] -> [B, out_dim]."""
    batch, in_dim = x.shape
    out_dim = g_w.shape[0]

    # Lane-dense output and (for small in_dim) lane-dense contraction.
    out_p = _round_up(out_dim, _LANE)
    in_p = _round_up(in_dim, _LANE) if in_dim < _LANE else _round_up(in_dim, _SUBLANE)

    # NAC weight computed ONCE in the wrapper (not per grid step); weights
    # pre-transposed to [in, out], zero-padded, concatenated into [W | G].
    w_nac = jnp.tanh(w_hat.astype(jnp.float32)) * jax.nn.sigmoid(
        m_hat.astype(jnp.float32))

    def prep(wm):
        return jnp.pad(wm.T, ((0, in_p - in_dim), (0, out_p - out_dim)))

    wg = jnp.concatenate([prep(w_nac), prep(g_w.astype(jnp.float32))], axis=1)

    # Batch tiling: sublane multiple, capped by the VMEM budget (keeps the
    # same code valid on v7x's 64 MiB as well as v5e/v6e's 128 MiB).
    b_p = _round_up(batch, _SUBLANE)
    tb = min(b_p, batch_tile)
    tb = _cap_batch_tile(tb, in_p, out_p, vmem_budget_bytes)
    # Give the "parallel" axis >= 2 steps when the batch allows, so v7x's
    # second TensorCore gets work (irrelevant on single-TC v5e/v6e).
    if b_p // tb < 2 and b_p >= 2 * _SUBLANE:
        tb = _round_up((b_p + 1) // 2, _SUBLANE)
    b_p = _round_up(b_p, tb)

    # Pad x batch rows and contraction cols with 1.0: padded weight rows/cols
    # are zero so results are unchanged, and the log path stays finite.
    x_p = jnp.pad(x.astype(jnp.float32),
                  ((0, b_p - batch), (0, in_p - in_dim)),
                  constant_values=1.0)

    grid = (b_p // tb,)
    cost = pl.CostEstimate(
        flops=6 * b_p * in_p * out_p,                      # (2*B)*in*out + B*in*out dots
        transcendentals=b_p * in_p + 2 * b_p * out_p,      # log, sigmoid(gate), exp(m)
        bytes_accessed=4 * (b_p * in_p + 2 * in_p * out_p + b_p * out_p),
    )

    y_full = pl.pallas_call(
        _nalu_kernel,
        out_shape=jax.ShapeDtypeStruct((b_p, out_p), jnp.float32),
        grid=grid,
        in_specs=[
            pl.BlockSpec((tb, in_p), lambda i: (i, 0)),        # x: tiled on batch
            pl.BlockSpec((in_p, 2 * out_p), lambda i: (0, 0)), # [W | G]: resident
        ],
        out_specs=pl.BlockSpec((tb, out_p), lambda i: (i, 0)),
        compiler_params=pltpu.CompilerParams(
            dimension_semantics=("parallel",),
            vmem_limit_bytes=32 << 20),
        cost_estimate=cost,
    )(x_p, wg)

    return y_full[:batch, :out_dim]


def kaiming_uniform(key, shape, a=math.sqrt(5.0)):
    """Deterministic equivalent of torch.nn.init.kaiming_uniform_ (fan_in mode)."""
    fan_in = shape[1]
    gain = math.sqrt(2.0 / (1.0 + a * a))
    bound = gain * math.sqrt(3.0 / fan_in)
    return jax.random.uniform(key, shape, jnp.float32, minval=-bound, maxval=bound)


def nalu_reference(x, g_w, w_hat, m_hat):
    w = jnp.tanh(w_hat) * jax.nn.sigmoid(m_hat)
    a = x @ w.T
    g = jax.nn.sigmoid(x @ g_w.T)
    m = jnp.exp(jnp.log(jnp.abs(x) + EPS) @ w.T)
    return g * a + (1.0 - g) * m


if __name__ == "__main__":
    in_dim, out_dim, batch = 32, 32, 8

    key = jax.random.PRNGKey(0)
    k_x, k_g, k_w, k_m = jax.random.split(key, 4)

    x = jax.random.normal(k_x, (batch, in_dim), jnp.float32)
    g_w = kaiming_uniform(k_g, (out_dim, in_dim))      # self.G
    w_hat = kaiming_uniform(k_w, (out_dim, in_dim))    # nac.W_hat
    m_hat = kaiming_uniform(k_m, (out_dim, in_dim))    # nac.M_hat

    y = nalu_forward(x, g_w, w_hat, m_hat)
    y = jax.block_until_ready(y)

    y_ref = nalu_reference(x, g_w, w_hat, m_hat)
    assert y.shape == (batch, out_dim)
    assert jnp.allclose(y, y_ref, atol=1e-4, rtol=1e-4), "mismatch vs reference"

    print("KERNEL_OK")
</pallas_src>

<mosaic_0001>
module attributes {stable_mosaic.version = 11 : i64} {
  func.func @_nalu_kernel(%arg0: i32, %arg1: memref<8x128xf32, #tpu.memory_space<vmem>>, %arg2: memref<128x256xf32, #tpu.memory_space<vmem>>, %arg3: memref<8x128xf32, #tpu.memory_space<vmem>>) attributes {dimension_semantics = [#tpu.dimension_semantics<parallel>], iteration_bounds = array<i64: 1>, scalar_prefetch = 0 : i64, scratch_operands = 0 : i64, tpu.core_type = #tpu.core_type<tc>, window_params = [{transform_indices = @transform_0, window_bounds = array<i64: 8, 128>}, {pipeline_mode = #tpu.pipeline_mode<synchronous>, transform_indices = @transform_1, window_bounds = array<i64: 128, 256>}, {transform_indices = @transform_2, window_bounds = array<i64: 8, 128>}]} {
    %c0 = arith.constant 0 : index
    %c0_0 = arith.constant 0 : index
    %0 = vector.load %arg1[%c0, %c0_0] : memref<8x128xf32, #tpu.memory_space<vmem>>, vector<8x128xf32>
    %c0_1 = arith.constant 0 : index
    %c0_2 = arith.constant 0 : index
    %1 = vector.load %arg2[%c0_1, %c0_2] : memref<128x256xf32, #tpu.memory_space<vmem>>, vector<128x128xf32>
    %c0_3 = arith.constant 0 : index
    %c128 = arith.constant 128 : index
    %2 = vector.load %arg2[%c0_3, %c128] : memref<128x256xf32, #tpu.memory_space<vmem>>, vector<128x128xf32>
    %3 = math.absf %0 : vector<8x128xf32>
    %cst = arith.constant 9.99999993E-9 : f32
    %4 = vector.broadcast %cst : f32 to vector<8x128xf32>
    %5 = arith.addf %3, %4 : vector<8x128xf32>
    %6 = math.log %5 : vector<8x128xf32>
    %7 = tpu.concatenate %0, %6 in 0 : vector<8x128xf32>, vector<8x128xf32> -> vector<16x128xf32>
    %cst_4 = arith.constant dense<0.000000e+00> : vector<16x128xf32>
    %8 = tpu.matmul %7, %1, %cst_4 {dimension_numbers = #tpu.dot_dimension_numbers<[1], [0], [0], [1], [0, 0, 1, 1], [], []>} : vector<16x128xf32>, vector<128x128xf32>, vector<16x128xf32> -> vector<16x128xf32>
    %9 = vector.extract_strided_slice %8 {offsets = [0, 0], sizes = [8, 128], strides = [1, 1]} : vector<16x128xf32> to vector<8x128xf32>
    %10 = vector.extract_strided_slice %8 {offsets = [8, 0], sizes = [8, 128], strides = [1, 1]} : vector<16x128xf32> to vector<8x128xf32>
    %cst_5 = arith.constant dense<0.000000e+00> : vector<8x128xf32>
    %11 = tpu.matmul %0, %2, %cst_5 {dimension_numbers = #tpu.dot_dimension_numbers<[1], [0], [0], [1], [0, 0, 1, 1], [], []>} : vector<8x128xf32>, vector<128x128xf32>, vector<8x128xf32> -> vector<8x128xf32>
    %12 = arith.negf %11 : vector<8x128xf32>
    %13 = math.exp %12 : vector<8x128xf32>
    %cst_6 = arith.constant 1.000000e+00 : f32
    %14 = vector.broadcast %cst_6 : f32 to vector<8x128xf32>
    %15 = arith.addf %14, %13 : vector<8x128xf32>
    %16 = arith.divf %14, %15 : vector<8x128xf32>
    %17 = math.exp %10 : vector<8x128xf32>
    %18 = arith.subf %9, %17 : vector<8x128xf32>
    %19 = arith.mulf %16, %18 : vector<8x128xf32>
    %20 = arith.addf %17, %19 : vector<8x128xf32>
    %c0_7 = arith.constant 0 : index
    %c0_8 = arith.constant 0 : index
    %21 = vector.load %arg3[%c0_7, %c0_8] : memref<8x128xf32, #tpu.memory_space<vmem>>, vector<8x128xf32>
    tpu.vector_store %arg3[%c0_7, %c0_8], %20 {strides = array<i32>} : memref<8x128xf32, #tpu.memory_space<vmem>>, vector<8x128xf32>,
    return
  }
  func.func @transform_0(%arg0: i32) -> (i32, i32) {
    %c0_i32 = arith.constant 0 : i32
    %c0_i32_0 = arith.constant 0 : i32
    return %arg0, %c0_i32 : i32, i32
  }
  func.func @transform_1(%arg0: i32) -> (i32, i32) {
    %c0_i32 = arith.constant 0 : i32
    %c0_i32_0 = arith.constant 0 : i32
    %c0_i32_1 = arith.constant 0 : i32
    return %c0_i32, %c0_i32_0 : i32, i32
  }
  func.func @transform_2(%arg0: i32) -> (i32, i32) {
    %c0_i32 = arith.constant 0 : i32
    %c0_i32_0 = arith.constant 0 : i32
    return %arg0, %c0_i32 : i32, i32
  }
}

</mosaic_0001>

<llo_original>
// kernel: tpu_custom_call.1
$region0: #{tpu_custom_call.1}
  #allocation0 [shape = 'u32[]', space=smem, size = 0x4, offset = 0x4, fixed_abs, tag = 'smem constant byte address 0x4 - core index']
  #allocation1 [shape = 'u32[144,128]{1,0:T(1,128)}', space=vmem, size = 0x12000, scoped, tag = 'internal scratch']
  %s0 = inlined_call_operand.hbm [shape: f32[8,128], index: 0, kind: input, shape index: {}]
  %s1 = inlined_call_operand.hbm [shape: f32[128,256], index: 1, kind: input, shape index: {}]
  %s2 = inlined_call_operand.hbm [shape: f32[8,128], index: 2, kind: output, shape index: {}]
  %s3 = sld [smem:[#allocation0]]
  $region26: #{tpu_custom_call.1} parent=0
    _
  %s5 = ssub.s32 1, %s3
  %s6 = scalar_select 0, %s5, %s3
  $region1: #{tpu_custom_call.1} parent=0
    #allocation2 [shape = 'u8[4096]{0}', space=vmem, size = 0x1000, scoped, tag = 'input window, operand 0, single buffered']
    #allocation3 [shape = 's32[1]{0}', space=sflag, size = 0x4, scoped, tag = 'scoped memory for tpu_custom_call.1']
    #allocation4 [shape = 's32[1]{0}', space=sflag, size = 0x4, scoped, tag = 'scoped memory for tpu_custom_call.1']
    #allocation5 [shape = 'u8[131072]{0}', space=vmem, size = 0x20000, scoped, tag = 'input window, operand 1, single buffered']
    #allocation6 [shape = 's32[1]{0}', space=sflag, size = 0x4, scoped, tag = 'scoped memory for tpu_custom_call.1']
    #allocation7 [shape = 'u8[4096]{0}', space=vmem, size = 0x1000, scoped, tag = 'output window, operand 0, single buffered']
    %7 = vsyncpa [#allocation3], 0
    %8 = vsyncpa [#allocation6], 0
    %9 = vsyncpa [#allocation4], 0
    // Predicated region
    $region2: #{tpu_custom_call.1} parent=1 // pred_check
      _
    $region3: #{tpu_custom_call.1} parent=1 // pred_check_branch
      %11 = sbr.rel (0) target = $region5
    $region4: #{tpu_custom_call.1} parent=1 // pred_region
      %s13 = ssub.s32 128, 128
      %14 = vsyncadd [#allocation3], %s13
      %s16 = sshll.u32 [#allocation2], 4
      %s17 = int_to_ptr.vmem [resolvable:$true] %s16
      %19 = dma.hbm_to_vmem [thread:$0]  %s0, 128, %s17, [#allocation3]
    $region5: #{tpu_custom_call.1} parent=1 // pred_fallthru
      _
    // Predicated region
    $region6: #{tpu_custom_call.1} parent=1 // pred_check
      _
    $region7: #{tpu_custom_call.1} parent=1 // pred_check_branch
      %21 = sbr.rel (0) target = $region9
    $region8: #{tpu_custom_call.1} parent=1 // pred_region
      %s23 = ssub.s32 4096, 4096
      %24 = vsyncadd [#allocation6], %s23
      %s25 = sshll.u32 [#allocation5], 4
      %s26 = int_to_ptr.vmem [resolvable:$true] %s25
      %31 = dma.hbm_to_vmem [thread:$0]  %s1, 4096, %s26, [#allocation6], 256, 256, 16
    $region9: #{tpu_custom_call.1} parent=1 // pred_fallthru
      _
    // Predicated region
    $region10: #{tpu_custom_call.1} parent=1 // pred_check
      _
    $region11: #{tpu_custom_call.1} parent=1 // pred_check_branch
      %33 = sbr.rel (0) target = $region13
    $region12: #{tpu_custom_call.1} parent=1 // pred_region
      %34 = dma.done [#allocation3], 128
    $region13: #{tpu_custom_call.1} parent=1 // pred_fallthru
      _
    // Predicated region
    $region14: #{tpu_custom_call.1} parent=1 // pred_check
      _
    $region15: #{tpu_custom_call.1} parent=1 // pred_check_branch
      %36 = sbr.rel (0) target = $region17
    $region16: #{tpu_custom_call.1} parent=1 // pred_region
      %37 = dma.done [#allocation6], 4096
    $region17: #{tpu_custom_call.1} parent=1 // pred_fallthru
      _
    %v38 = vld [vmem:[#allocation2] sm:$0xff]
    %v39 = vld [vmem:[#allocation5] sm:$0xff]
    %v40 = vld [vmem:[#allocation5 + $0x10] sm:$0xff]
    %v41 = vld [vmem:[#allocation5 + $0x20] sm:$0xff]
    %v42 = vld [vmem:[#allocation5 + $0x30] sm:$0xff]
    %v43 = vld [vmem:[#allocation5 + $0x40] sm:$0xff]
    %v44 = vld [vmem:[#allocation5 + $0x50] sm:$0xff]
    %v45 = vld [vmem:[#allocation5 + $0x60] sm:$0xff]
    %v46 = vld [vmem:[#allocation5 + $0x70] sm:$0xff]
    %v47 = vld [vmem:[#allocation5 + $0x80] sm:$0xff]
    %v48 = vld [vmem:[#allocation5 + $0x90] sm:$0xff]
    %v49 = vld [vmem:[#allocation5 + $0xa0] sm:$0xff]
    %v50 = vld [vmem:[#allocation5 + $0xb0] sm:$0xff]
    %v51 = vld [vmem:[#allocation5 + $0xc0] sm:$0xff]
    %v52 = vld [vmem:[#allocation5 + $0xd0] sm:$0xff]
    %v53 = vld [vmem:[#allocation5 + $0xe0] sm:$0xff]
    %v54 = vld [vmem:[#allocation5 + $0xf0] sm:$0xff]
    %v55 = vld [vmem:[#allocation5 + $0x8] sm:$0xff]
    %v56 = vld [vmem:[#allocation5 + $0x18] sm:$0xff]
    %v57 = vld [vmem:[#allocation5 + $0x28] sm:$0xff]
    %v58 = vld [vmem:[#allocation5 + $0x38] sm:$0xff]
    %v59 = vld [vmem:[#allocation5 + $0x48] sm:$0xff]
    %v60 = vld [vmem:[#allocation5 + $0x58] sm:$0xff]
    %v61 = vld [vmem:[#allocation5 + $0x68] sm:$0xff]
    %v62 = vld [vmem:[#allocation5 + $0x78] sm:$0xff]
    %v63 = vld [vmem:[#allocation5 + $0x88] sm:$0xff]
    %v64 = vld [vmem:[#allocation5 + $0x98] sm:$0xff]
    %v65 = vld [vmem:[#allocation5 + $0xa8] sm:$0xff]
    %v66 = vld [vmem:[#allocation5 + $0xb8] sm:$0xff]
    %v67 = vld [vmem:[#allocation5 + $0xc8] sm:$0xff]
    %v68 = vld [vmem:[#allocation5 + $0xd8] sm:$0xff]
    %v69 = vld [vmem:[#allocation5 + $0xe8] sm:$0xff]
    %v70 = vld [vmem:[#allocation5 + $0xf8] sm:$0xff]
    %v71 = vand.u32 2147483647, %v38
    %v72 = vadd.f32 %v71, 1e-08
    %v73 = vlog2.pop %v72
    %v74 = vmul.f32 %v73, 0.6931472
    %75 = vmatprep.subr.mxu0 0.0
    %76 = vmatpush1.msra.mxu0 %v54
    %77 = vmatprep.subr.mxu0 0.0
    %78 = vmatpush1.msra.mxu0 %v53
    %79 = vmatprep.subr.mxu0 0.0
    %80 = vmatpush1.msra.mxu0 %v52
    %81 = vmatprep.subr.mxu0 0.0
    %82 = vmatpush1.msra.mxu0 %v51
    %83 = vmatprep.subr.mxu0 0.0
    %84 = vmatpush1.msra.mxu0 %v50
    %85 = vmatprep.subr.mxu0 0.0
    %86 = vmatpush1.msra.mxu0 %v49
    %87 = vmatprep.subr.mxu0 0.0
    %88 = vmatpush1.msra.mxu0 %v48
    %89 = vmatprep.subr.mxu0 0.0
    %90 = vmatpush1.msra.mxu0 %v47
    %91 = vmatprep.subr.mxu0 0.0
    %92 = vmatpush1.msra.mxu0 %v46
    %93 = vmatprep.subr.mxu0 0.0
    %94 = vmatpush1.msra.mxu0 %v45
    %95 = vmatprep.subr.mxu0 0.0
    %96 = vmatpush1.msra.mxu0 %v44
    %97 = vmatprep.subr.mxu0 0.0
    %98 = vmatpush1.msra.mxu0 %v43
    %99 = vmatprep.subr.mxu0 0.0
    %100 = vmatpush1.msra.mxu0 %v42
    %101 = vmatprep.subr.mxu0 0.0
    %102 = vmatpush1.msra.mxu0 %v41
    %103 = vmatprep.subr.mxu0 0.0
    %104 = vmatpush1.msra.mxu0 %v40
    %105 = vmatprep.subr.mxu0 0.0
    %106 = vmatpush1.msra.mxu0 %v39
    %107 = vmatprep.subr.mxu0 0.0
    %108 = vmatpush2.msra.mxu0 0.0
    %109 = vmatprep.subr.mxu0 0.0
    %110 = vmatpush2.msra.mxu0 0.0
    %111 = vmatprep.subr.mxu0 0.0
    %112 = vmatpush2.msra.mxu0 0.0
    %113 = vmatprep.subr.mxu0 0.0
    %114 = vmatpush2.msra.mxu0 0.0
    %115 = vmatprep.subr.mxu0 0.0
    %116 = vmatpush2.msra.mxu0 0.0
    %117 = vmatprep.subr.mxu0 0.0
    %118 = vmatpush2.msra.mxu0 0.0
    %119 = vmatprep.subr.mxu0 0.0
    %120 = vmatpush2.msra.mxu0 0.0
    %121 = vmatprep.subr.mxu0 0.0
    %122 = vmatpush2.msra.mxu0 0.0
    %123 = vmatprep.subr.mxu0 0.0
    %124 = vmatpush2.msra.mxu0 0.0
    %125 = vmatprep.subr.mxu0 0.0
    %126 = vmatpush2.msra.mxu0 0.0
    %127 = vmatprep.subr.mxu0 0.0
    %128 = vmatpush2.msra.mxu0 0.0
    %129 = vmatprep.subr.mxu0 0.0
    %130 = vmatpush2.msra.mxu0 0.0
    %131 = vmatprep.subr.mxu0 0.0
    %132 = vmatpush2.msra.mxu0 0.0
    %133 = vmatprep.subr.mxu0 0.0
    %134 = vmatpush2.msra.mxu0 0.0
    %135 = vmatprep.subr.mxu0 0.0
    %136 = vmatpush2.msra.mxu0 0.0
    %137 = vmatprep.subr.mxu0 0.0
    %138 = vmatpush2.msra.mxu0 0.0
    %139 = vmatprep.mubr.f32.mxu0 0.0
    %140 = vmatmul.mubr.f32.gmra.mxu0 %v38
    %v141 = vpop.f32.mrf.mxu0
    %v142 = vadd.f32 0.0, %v141
    %v143 = vpop.f32.mrf.mxu0
    %144 = vmatprep.mubr.f32.mxu0 0.0
    %145 = vmatmul.mubr.f32.gmra.mxu0 %v74
    %v146 = vpop.f32.mrf.mxu0
    %v147 = vadd.f32 0.0, %v146
    %v148 = vpop.f32.mrf.mxu0
    %149 = vdwg.mxu0
    %150 = vmatprep.subr.mxu0 0.0
    %151 = vmatpush1.msra.mxu0 %v70
    %152 = vmatprep.subr.mxu0 0.0
    %153 = vmatpush1.msra.mxu0 %v69
    %154 = vmatprep.subr.mxu0 0.0
    %155 = vmatpush1.msra.mxu0 %v68
    %156 = vmatprep.subr.mxu0 0.0
    %157 = vmatpush1.msra.mxu0 %v67
    %158 = vmatprep.subr.mxu0 0.0
    %159 = vmatpush1.msra.mxu0 %v66
    %160 = vmatprep.subr.mxu0 0.0
    %161 = vmatpush1.msra.mxu0 %v65
    %162 = vmatprep.subr.mxu0 0.0
    %163 = vmatpush1.msra.mxu0 %v64
    %164 = vmatprep.subr.mxu0 0.0
    %165 = vmatpush1.msra.mxu0 %v63
    %166 = vmatprep.subr.mxu0 0.0
    %167 = vmatpush1.msra.mxu0 %v62
    %168 = vmatprep.subr.mxu0 0.0
    %169 = vmatpush1.msra.mxu0 %v61
    %170 = vmatprep.subr.mxu0 0.0
    %171 = vmatpush1.msra.mxu0 %v60
    %172 = vmatprep.subr.mxu0 0.0
    %173 = vmatpush1.msra.mxu0 %v59
    %174 = vmatprep.subr.mxu0 0.0
    %175 = vmatpush1.msra.mxu0 %v58
    %176 = vmatprep.subr.mxu0 0.0
    %177 = vmatpush1.msra.mxu0 %v57
    %178 = vmatprep.subr.mxu0 0.0
    %179 = vmatpush1.msra.mxu0 %v56
    %180 = vmatprep.subr.mxu0 0.0
    %181 = vmatpush1.msra.mxu0 %v55
    %182 = vmatprep.subr.mxu0 0.0
    %183 = vmatpush2.msra.mxu0 0.0
    %184 = vmatprep.subr.mxu0 0.0
    %185 = vmatpush2.msra.mxu0 0.0
    %186 = vmatprep.subr.mxu0 0.0
    %187 = vmatpush2.msra.mxu0 0.0
    %188 = vmatprep.subr.mxu0 0.0
    %189 = vmatpush2.msra.mxu0 0.0
    %190 = vmatprep.subr.mxu0 0.0
    %191 = vmatpush2.msra.mxu0 0.0
    %192 = vmatprep.subr.mxu0 0.0
    %193 = vmatpush2.msra.mxu0 0.0
    %194 = vmatprep.subr.mxu0 0.0
    %195 = vmatpush2.msra.mxu0 0.0
    %196 = vmatprep.subr.mxu0 0.0
    %197 = vmatpush2.msra.mxu0 0.0
    %198 = vmatprep.subr.mxu0 0.0
    %199 = vmatpush2.msra.mxu0 0.0
    %200 = vmatprep.subr.mxu0 0.0
    %201 = vmatpush2.msra.mxu0 0.0
    %202 = vmatprep.subr.mxu0 0.0
    %203 = vmatpush2.msra.mxu0 0.0
    %204 = vmatprep.subr.mxu0 0.0
    %205 = vmatpush2.msra.mxu0 0.0
    %206 = vmatprep.subr.mxu0 0.0
    %207 = vmatpush2.msra.mxu0 0.0
    %208 = vmatprep.subr.mxu0 0.0
    %209 = vmatpush2.msra.mxu0 0.0
    %210 = vmatprep.subr.mxu0 0.0
    %211 = vmatpush2.msra.mxu0 0.0
    %212 = vmatprep.subr.mxu0 0.0
    %213 = vmatpush2.msra.mxu0 0.0
    %214 = vmatprep.mubr.f32.mxu0 0.0
    %215 = vmatmul.mubr.f32.gmra.mxu0 %v38
    %v216 = vpop.f32.mrf.mxu0
    %v217 = vadd.f32 0.0, %v216
    %v218 = vpop.f32.mrf.mxu0
    %219 = vdwg.mxu0
    %v220 = vxor.u32 %v217, 2147483648
    %v221 = vmul.f32 %v220, 1.442695
    %v222 = vpow.pop %v221
    %v223 = vadd.f32 %v222, 1.0
    %v224 = vrcp.pop %v223
    %v225 = vmul.f32 1.0, %v224
    %v226 = vmul.f32 %v147, 1.442695
    %v227 = vpow.pop %v226
    %v228 = vsub.f32 %v142, %v227
    %v229 = vmul.f32 %v225, %v228
    %v230 = vadd.f32 %v227, %v229
    %231 = vst [vmem:[#allocation7] sm:$0xff] %v230
    // Predicated region
    $region18: #{tpu_custom_call.1} parent=1 // pred_check
      _
    $region19: #{tpu_custom_call.1} parent=1 // pred_check_branch
      %233 = sbr.rel (0) target = $region21
    $region20: #{tpu_custom_call.1} parent=1 // pred_region
      %s235 = ssub.s32 128, 128
      %236 = vsyncadd [#allocation4], %s235
      %s238 = sshll.u32 [#allocation7], 4
      %s239 = int_to_ptr.vmem [resolvable:$true] %s238
      %241 = dma.vmem_to_hbm [thread:$0]  %s239, 128, %s2, [#allocation4]
    $region21: #{tpu_custom_call.1} parent=1 // pred_fallthru
      _
    // Predicated region
    $region22: #{tpu_custom_call.1} parent=1 // pred_check
      _
    $region23: #{tpu_custom_call.1} parent=1 // pred_check_branch
      %243 = sbr.rel (0) target = $region25
    $region24: #{tpu_custom_call.1} parent=1 // pred_region
      %244 = dma.done [#allocation4], 128
    $region25: #{tpu_custom_call.1} parent=1 // pred_fallthru
      _
    %245 = vsyncpa [#allocation3], 1
    %246 = vsyncpa [#allocation6], 1
    %247 = vsyncpa [#allocation4], 1

</llo_original>
